<compile_context>
chip_gen: v5e
topology: v5e:2x2
jax: 0.10.0
libtpu: 0.0.40
codegen_flags: <defaults>
</compile_context>

<pallas_src>
import jax
import jax.numpy as jnp
from jax import lax
from jax.experimental import pallas as pl
from jax.experimental.pallas import tpu as pltpu


def _mlp_policy_kernel(x_ref, w1_ref, b1_ref, w2_ref, b2_ref, wm_ref, bm_ref,
                       out_ref):
    # x_ref: (tm, state_dim); weights in PyTorch [out, in] layout; biases are
    # (out, 1) columns that broadcast along the lane (batch) axis.
    #
    # Layer 1: h1 = tanh(W1 @ x^T + b1)   -> (hidden1, tm), batch on lanes.
    h = lax.dot_general(
        w1_ref[...], x_ref[...],
        dimension_numbers=(((1,), (1,)), ((), ())),   # contract x's last dim
        preferred_element_type=jnp.float32)
    h = jnp.tanh(h + b1_ref[...])

    # Layer 2: h2 = tanh(W2 @ h1 + b2)    -> (hidden2, tm)
    h = jnp.dot(w2_ref[...], h.astype(w2_ref.dtype),
                preferred_element_type=jnp.float32)
    h = jnp.tanh(h + b2_ref[...])

    # Mean head (no activation):  means^T = Wm @ h2 + bm  -> (act_dim, tm)
    m = jnp.dot(wm_ref[...], h.astype(wm_ref.dtype),
                preferred_element_type=jnp.float32)
    out_ref[...] = (m + bm_ref[...]).astype(out_ref.dtype)


def relaxed_policy_forward(x, params, *, block_batch=512, compute_dtype=None):
    """Forward pass of the relaxed continuous policy.

    x:      [B, state_dim] float32
    params: {"affine": [(w1, b1), (w2, b2)], "final_mean": (wm, bm)}
            with PyTorch Linear layout, i.e. w is [out, in].
    block_batch:   target batch tile (rounded to a multiple of 128, capped so
                   large batches get >= 2 grid tiles for v7x's two TCs).
    compute_dtype: e.g. jnp.bfloat16 to feed the MXU in bf16 (accumulation,
                   bias add and tanh stay f32).  None keeps everything f32.
    """
    (w1, b1), (w2, b2) = params["affine"]
    wm, bm = params["final_mean"]

    B, state_dim = x.shape
    hidden1 = w1.shape[0]
    hidden2 = w2.shape[0]
    act_dim = wm.shape[0]
    out_dtype = x.dtype

    if compute_dtype is not None:
        # For production callers, cast x upstream so this isn't an extra pass.
        x = x.astype(compute_dtype)
        w1 = w1.astype(compute_dtype)
        w2 = w2.astype(compute_dtype)
        wm = wm.astype(compute_dtype)

    # Biases as (out, 1) f32 columns -> broadcast over the lane (batch) axis.
    b1_c = b1.astype(jnp.float32)[:, None]
    b2_c = b2.astype(jnp.float32)[:, None]
    bm_c = bm.astype(jnp.float32)[:, None]

    # Batch tile size.  tm is the lane/N dimension of every matmul result:
    #   * B <= 256: single full-extent tile (full-dim blocks bypass (8,128)).
    #   * B  > 256: multiple of 128 (256-friendly default), in [128, 1024],
    #     capped at ceil(ceil(B/2)/128)*128 so there are >= 2 grid tiles
    #     (keeps both v7x TensorCores busy via the "parallel" axis).
    if B <= 256:
        tm = B
    else:
        tm = min(max(block_batch, 128), 1024)
        tm = (tm // 128) * 128
        half_up = ((-(-B // 2)) + 127) // 128 * 128
        tm = min(tm, half_up)
    n_tiles = pl.cdiv(B, tm)

    def _resident(shape):
        # Full-array block whose block index never changes across the grid:
        # DMA'd into VMEM once, stays resident for every batch tile.
        nblk = len(shape)
        return pl.BlockSpec(shape, lambda i, _n=nblk: (0,) * _n)

    out_t = pl.pallas_call(
        _mlp_policy_kernel,
        out_shape=jax.ShapeDtypeStruct((act_dim, B), out_dtype),
        grid=(n_tiles,),
        in_specs=[
            pl.BlockSpec((tm, state_dim), lambda i: (i, 0)),   # x batch tiles
            _resident((hidden1, state_dim)),                   # W1 [out, in]
            _resident((hidden1, 1)),                           # b1 column
            _resident((hidden2, hidden1)),                     # W2 [out, in]
            _resident((hidden2, 1)),                           # b2 column
            _resident((act_dim, hidden2)),                     # Wm [out, in]
            _resident((act_dim, 1)),                           # bm column
        ],
        # Lane-dense output tile: batch rides the lane axis.
        out_specs=pl.BlockSpec((act_dim, tm), lambda i: (0, i)),
        compiler_params=pltpu.CompilerParams(
            dimension_semantics=("parallel",)),
    )(x, w1, b1_c, w2, b2_c, wm, bm_c)

    # Module contract returns (B, act_dim); transpose of the small head output.
    return out_t.T


def _init_linear(key, out_dim, in_dim):
    # deterministic, PyTorch-style uniform(-1/sqrt(in), 1/sqrt(in)) init
    kw, kb = jax.random.split(key)
    bound = 1.0 / jnp.sqrt(jnp.float32(in_dim))
    w = jax.random.uniform(kw, (out_dim, in_dim), jnp.float32, -bound, bound)
    b = jax.random.uniform(kb, (out_dim,), jnp.float32, -bound, bound)
    return w, b


if __name__ == "__main__":
    key = jax.random.PRNGKey(0)
    k_x, k1, k2, k3 = jax.random.split(key, 4)

    # Small shapes consistent with a PPO policy MLP head.
    batch, state_dim, hidden, act_dim = 16, 16, 32, 8

    x = jax.random.normal(k_x, (batch, state_dim), jnp.float32)
    params = {
        "affine": [
            _init_linear(k1, hidden, state_dim),   # affine_layers[0]
            _init_linear(k2, hidden, hidden),      # affine_layers[1]
        ],
        "final_mean": _init_linear(k3, act_dim, hidden),
    }

    means = relaxed_policy_forward(x, params)
    jax.block_until_ready(means)

    # reference check in plain JAX (same math, same PyTorch weight layout)
    h = jnp.tanh(x @ params["affine"][0][0].T + params["affine"][0][1])
    h = jnp.tanh(h @ params["affine"][1][0].T + params["affine"][1][1])
    ref = h @ params["final_mean"][0].T + params["final_mean"][1]
    assert means.shape == (batch, act_dim)
    assert jnp.allclose(means, ref, atol=1e-5, rtol=1e-5)

    print("KERNEL_OK")
</pallas_src>

<mosaic_0001>
module attributes {stable_mosaic.version = 11 : i64} {
  func.func @_mlp_policy_kernel(%arg0: i32, %arg1: memref<16x16xf32, #tpu.memory_space<vmem>>, %arg2: memref<32x16xf32, #tpu.memory_space<vmem>>, %arg3: memref<32x1xf32, #tpu.memory_space<vmem>>, %arg4: memref<32x32xf32, #tpu.memory_space<vmem>>, %arg5: memref<32x1xf32, #tpu.memory_space<vmem>>, %arg6: memref<8x32xf32, #tpu.memory_space<vmem>>, %arg7: memref<8x1xf32, #tpu.memory_space<vmem>>, %arg8: memref<8x16xf32, #tpu.memory_space<vmem>>) attributes {dimension_semantics = [#tpu.dimension_semantics<parallel>], iteration_bounds = array<i64: 1>, scalar_prefetch = 0 : i64, scratch_operands = 0 : i64, tpu.core_type = #tpu.core_type<tc>, window_params = [{transform_indices = @transform_0, window_bounds = array<i64: 16, 16>}, {pipeline_mode = #tpu.pipeline_mode<synchronous>, transform_indices = @transform_1, window_bounds = array<i64: 32, 16>}, {pipeline_mode = #tpu.pipeline_mode<synchronous>, transform_indices = @transform_2, window_bounds = array<i64: 32, 1>}, {pipeline_mode = #tpu.pipeline_mode<synchronous>, transform_indices = @transform_3, window_bounds = array<i64: 32, 32>}, {pipeline_mode = #tpu.pipeline_mode<synchronous>, transform_indices = @transform_4, window_bounds = array<i64: 32, 1>}, {pipeline_mode = #tpu.pipeline_mode<synchronous>, transform_indices = @transform_5, window_bounds = array<i64: 8, 32>}, {pipeline_mode = #tpu.pipeline_mode<synchronous>, transform_indices = @transform_6, window_bounds = array<i64: 8, 1>}, {transform_indices = @transform_7, window_bounds = array<i64: 8, 16>}]} {
    %c0 = arith.constant 0 : index
    %c0_0 = arith.constant 0 : index
    %0 = vector.load %arg2[%c0, %c0_0] : memref<32x16xf32, #tpu.memory_space<vmem>>, vector<32x16xf32>
    %c0_1 = arith.constant 0 : index
    %c0_2 = arith.constant 0 : index
    %1 = vector.load %arg1[%c0_1, %c0_2] : memref<16x16xf32, #tpu.memory_space<vmem>>, vector<16x16xf32>
    %cst = arith.constant dense<0.000000e+00> : vector<32x16xf32>
    %2 = tpu.matmul %0, %1, %cst {dimension_numbers = #tpu.dot_dimension_numbers<[1], [1], [0], [0], [0, 0, 1, 0], [], []>} : vector<32x16xf32>, vector<16x16xf32>, vector<32x16xf32> -> vector<32x16xf32>
    %c0_3 = arith.constant 0 : index
    %c0_4 = arith.constant 0 : index
    %3 = vector.load %arg3[%c0_3, %c0_4] : memref<32x1xf32, #tpu.memory_space<vmem>>, vector<32x1xf32>
    %4 = vector.broadcast %3 : vector<32x1xf32> to vector<32x16xf32>
    %5 = arith.addf %2, %4 : vector<32x16xf32>
    %6 = math.tanh %5 : vector<32x16xf32>
    %c0_5 = arith.constant 0 : index
    %c0_6 = arith.constant 0 : index
    %7 = vector.load %arg4[%c0_5, %c0_6] : memref<32x32xf32, #tpu.memory_space<vmem>>, vector<32x32xf32>
    %cst_7 = arith.constant dense<0.000000e+00> : vector<32x16xf32>
    %8 = tpu.matmul %7, %6, %cst_7 {dimension_numbers = #tpu.dot_dimension_numbers<[1], [0], [0], [1], [0, 0, 1, 1], [], []>} : vector<32x32xf32>, vector<32x16xf32>, vector<32x16xf32> -> vector<32x16xf32>
    %c0_8 = arith.constant 0 : index
    %c0_9 = arith.constant 0 : index
    %9 = vector.load %arg5[%c0_8, %c0_9] : memref<32x1xf32, #tpu.memory_space<vmem>>, vector<32x1xf32>
    %10 = vector.broadcast %9 : vector<32x1xf32> to vector<32x16xf32>
    %11 = arith.addf %8, %10 : vector<32x16xf32>
    %12 = math.tanh %11 : vector<32x16xf32>
    %c0_10 = arith.constant 0 : index
    %c0_11 = arith.constant 0 : index
    %13 = vector.load %arg6[%c0_10, %c0_11] : memref<8x32xf32, #tpu.memory_space<vmem>>, vector<8x32xf32>
    %cst_12 = arith.constant dense<0.000000e+00> : vector<8x16xf32>
    %14 = tpu.matmul %13, %12, %cst_12 {dimension_numbers = #tpu.dot_dimension_numbers<[1], [0], [0], [1], [0, 0, 1, 1], [], []>} : vector<8x32xf32>, vector<32x16xf32>, vector<8x16xf32> -> vector<8x16xf32>
    %c0_13 = arith.constant 0 : index
    %c0_14 = arith.constant 0 : index
    %15 = vector.load %arg7[%c0_13, %c0_14] : memref<8x1xf32, #tpu.memory_space<vmem>>, vector<8x1xf32>
    %16 = vector.broadcast %15 : vector<8x1xf32> to vector<8x16xf32>
    %17 = arith.addf %14, %16 : vector<8x16xf32>
    %c0_15 = arith.constant 0 : index
    %c0_16 = arith.constant 0 : index
    %18 = vector.load %arg8[%c0_15, %c0_16] : memref<8x16xf32, #tpu.memory_space<vmem>>, vector<8x16xf32>
    tpu.vector_store %arg8[%c0_15, %c0_16], %17 {strides = array<i32>} : memref<8x16xf32, #tpu.memory_space<vmem>>, vector<8x16xf32>,
    return
  }
  func.func @transform_0(%arg0: i32) -> (i32, i32) {
    %c0_i32 = arith.constant 0 : i32
    %c0_i32_0 = arith.constant 0 : i32
    return %arg0, %c0_i32 : i32, i32
  }
  func.func @transform_1(%arg0: i32) -> (i32, i32) {
    %c0_i32 = arith.constant 0 : i32
    %c0_i32_0 = arith.constant 0 : i32
    %c0_i32_1 = arith.constant 0 : i32
    return %c0_i32, %c0_i32_0 : i32, i32
  }
  func.func @transform_2(%arg0: i32) -> (i32, i32) {
    %c0_i32 = arith.constant 0 : i32
    %c0_i32_0 = arith.constant 0 : i32
    %c0_i32_1 = arith.constant 0 : i32
    return %c0_i32, %c0_i32_0 : i32, i32
  }
  func.func @transform_3(%arg0: i32) -> (i32, i32) {
    %c0_i32 = arith.constant 0 : i32
    %c0_i32_0 = arith.constant 0 : i32
    %c0_i32_1 = arith.constant 0 : i32
    return %c0_i32, %c0_i32_0 : i32, i32
  }
  func.func @transform_4(%arg0: i32) -> (i32, i32) {
    %c0_i32 = arith.constant 0 : i32
    %c0_i32_0 = arith.constant 0 : i32
    %c0_i32_1 = arith.constant 0 : i32
    return %c0_i32, %c0_i32_0 : i32, i32
  }
  func.func @transform_5(%arg0: i32) -> (i32, i32) {
    %c0_i32 = arith.constant 0 : i32
    %c0_i32_0 = arith.constant 0 : i32
    %c0_i32_1 = arith.constant 0 : i32
    return %c0_i32, %c0_i32_0 : i32, i32
  }
  func.func @transform_6(%arg0: i32) -> (i32, i32) {
    %c0_i32 = arith.constant 0 : i32
    %c0_i32_0 = arith.constant 0 : i32
    %c0_i32_1 = arith.constant 0 : i32
    return %c0_i32, %c0_i32_0 : i32, i32
  }
  func.func @transform_7(%arg0: i32) -> (i32, i32) {
    %c0_i32 = arith.constant 0 : i32
    %c0_i32_0 = arith.constant 0 : i32
    return %c0_i32, %arg0 : i32, i32
  }
}

</mosaic_0001>

<llo_original>
// kernel: tpu_custom_call.1
$region0: #{tpu_custom_call.1}
  #allocation0 [shape = 'u32[]', space=smem, size = 0x4, offset = 0x4, fixed_abs, tag = 'smem constant byte address 0x4 - core index']
  #allocation1 [shape = 'u32[72,128]{1,0:T(1,128)}', space=vmem, size = 0x9000, scoped, tag = 'internal scratch']
  %s0 = inlined_call_operand.vmem [shape: f32[16,16], index: 0, kind: input, shape index: {}]
  %s1 = inlined_call_operand.vmem [shape: f32[32,16], index: 1, kind: input, shape index: {}]
  %s2 = inlined_call_operand.vmem [shape: f32[32,1], index: 2, kind: input, shape index: {}]
  %s3 = inlined_call_operand.vmem [shape: f32[32,32], index: 3, kind: input, shape index: {}]
  %s4 = inlined_call_operand.vmem [shape: f32[32,1], index: 4, kind: input, shape index: {}]
  %s5 = inlined_call_operand.vmem [shape: f32[8,32], index: 5, kind: input, shape index: {}]
  %s6 = inlined_call_operand.vmem [shape: f32[8,1], index: 6, kind: input, shape index: {}]
  %s7 = inlined_call_operand.hbm [shape: f32[8,16], index: 7, kind: output, shape index: {}]
  %s8 = sld [smem:[#allocation0]]
  $region38: #{tpu_custom_call.1} parent=0
    _
  %s10 = ssub.s32 1, %s8
  %s11 = scalar_select 0, %s10, %s8
  $region1: #{tpu_custom_call.1} parent=0
    #allocation2 [shape = 'u8[4096]{0}', space=vmem, size = 0x1000, scoped, tag = 'output window, operand 0, single buffered']
    #allocation3 [shape = 's32[1]{0}', space=sflag, size = 0x4, scoped, tag = 'scoped memory for tpu_custom_call.1']
    %12 = vsyncpa [#allocation3], 0
    // Predicated region
    $region2: #{tpu_custom_call.1} parent=1 // pred_check
      _
    $region3: #{tpu_custom_call.1} parent=1 // pred_check_branch
      %14 = sbr.rel (0) target = $region5
    $region4: #{tpu_custom_call.1} parent=1 // pred_region
      _
    $region5: #{tpu_custom_call.1} parent=1 // pred_fallthru
      _
    // Predicated region
    $region6: #{tpu_custom_call.1} parent=1 // pred_check
      _
    $region7: #{tpu_custom_call.1} parent=1 // pred_check_branch
      %16 = sbr.rel (0) target = $region9
    $region8: #{tpu_custom_call.1} parent=1 // pred_region
      _
    $region9: #{tpu_custom_call.1} parent=1 // pred_fallthru
      _
    // Predicated region
    $region10: #{tpu_custom_call.1} parent=1 // pred_check
      _
    $region11: #{tpu_custom_call.1} parent=1 // pred_check_branch
      %18 = sbr.rel (0) target = $region13
    $region12: #{tpu_custom_call.1} parent=1 // pred_region
      _
    $region13: #{tpu_custom_call.1} parent=1 // pred_fallthru
      _
    // Predicated region
    $region14: #{tpu_custom_call.1} parent=1 // pred_check
      _
    $region15: #{tpu_custom_call.1} parent=1 // pred_check_branch
      %20 = sbr.rel (0) target = $region17
    $region16: #{tpu_custom_call.1} parent=1 // pred_region
      _
    $region17: #{tpu_custom_call.1} parent=1 // pred_fallthru
      _
    // Predicated region
    $region18: #{tpu_custom_call.1} parent=1 // pred_check
      _
    $region19: #{tpu_custom_call.1} parent=1 // pred_check_branch
      %22 = sbr.rel (0) target = $region21
    $region20: #{tpu_custom_call.1} parent=1 // pred_region
      _
    $region21: #{tpu_custom_call.1} parent=1 // pred_fallthru
      _
    // Predicated region
    $region22: #{tpu_custom_call.1} parent=1 // pred_check
      _
    $region23: #{tpu_custom_call.1} parent=1 // pred_check_branch
      %24 = sbr.rel (0) target = $region25
    $region24: #{tpu_custom_call.1} parent=1 // pred_region
      _
    $region25: #{tpu_custom_call.1} parent=1 // pred_fallthru
      _
    // Predicated region
    $region26: #{tpu_custom_call.1} parent=1 // pred_check
      _
    $region27: #{tpu_custom_call.1} parent=1 // pred_check_branch
      %26 = sbr.rel (0) target = $region29
    $region28: #{tpu_custom_call.1} parent=1 // pred_region
      _
    $region29: #{tpu_custom_call.1} parent=1 // pred_fallthru
      _
    %v27 = vld [vmem:[%s1] sm:$0xff]
    %v28 = vld [vmem:[%s1 + $0x8] sm:$0xff]
    %v29 = vld [vmem:[%s1 + $0x10] sm:$0xff]
    %v30 = vld [vmem:[%s1 + $0x18] sm:$0xff]
    %v31 = vld [vmem:[%s0] sm:$0xff]
    %v32 = vld [vmem:[%s0 + $0x8] sm:$0xff]
    %v33 = vld [vmem:[%s2] sm:$0xff]
    %v34 = vld [vmem:[%s2 + $0x8] sm:$0xff]
    %v35 = vld [vmem:[%s2 + $0x10] sm:$0xff]
    %v36 = vld [vmem:[%s2 + $0x18] sm:$0xff]
    %38 = vset.pattern.permute.xlu0 0
    %39 = vperm.xlu0 %38, %v33
    %v40 = vpop.permute.xlu0 %39
    %43 = vset.pattern.permute.xlu0 0
    %44 = vperm.xlu0 %43, %v34
    %v45 = vpop.permute.xlu0 %44
    %48 = vset.pattern.permute.xlu0 0
    %49 = vperm.xlu0 %48, %v35
    %v50 = vpop.permute.xlu0 %49
    %53 = vset.pattern.permute.xlu0 0
    %54 = vperm.xlu0 %53, %v36
    %v55 = vpop.permute.xlu0 %54
    %vm57 = vcmask 130048
    %v59 = vsel %vm57, %v27, 0
    %v62 = vsel %vm57, %v28, 0
    %v65 = vsel %vm57, %v29, 0
    %v68 = vsel %vm57, %v30, 0
    %v71 = vsel %vm57, %v31, 0
    %v74 = vsel %vm57, %v32, 0
    %76 = vmatpush.xpose.msra.mxu0 0.0
    %77 = vmatpush.xpose.msra.mxu0 0.0
    %78 = vmatpush.xpose.msra.mxu0 0.0
    %79 = vmatpush.xpose.msra.mxu0 0.0
    %80 = vmatpush.xpose.msra.mxu0 0.0
    %81 = vmatpush.xpose.msra.mxu0 0.0
    %82 = vmatpush.xpose.msra.mxu0 0.0
    %83 = vmatpush.xpose.msra.mxu0 0.0
    %84 = vmatpush.xpose.msra.mxu0 0.0
    %85 = vmatpush.xpose.msra.mxu0 0.0
    %86 = vmatpush.xpose.msra.mxu0 0.0
    %87 = vmatpush.xpose.msra.mxu0 0.0
    %88 = vmatpush.xpose.msra.mxu0 0.0
    %89 = vmatpush.xpose.msra.mxu0 0.0
    %90 = vmatpush.xpose.msra.mxu0 %v74
    %91 = vmatpush.xpose.msra.mxu0 %v71
    %92 = vmatmul.f32.gmra.mxu0 %v59
    %v93 = vpop.f32.mrf.mxu0
    %v94 = vadd.f32 %v40, %v93
    %95 = vmatmul.f32.gmra.mxu0 %v62
    %v96 = vpop.f32.mrf.mxu0
    %v97 = vadd.f32 %v45, %v96
    %98 = vmatmul.f32.gmra.mxu0 %v65
    %v99 = vpop.f32.mrf.mxu0
    %v100 = vadd.f32 %v50, %v99
    %101 = vmatmul.f32.gmra.mxu0 %v68
    %v102 = vpop.f32.mrf.mxu0
    %v103 = vadd.f32 %v55, %v102
    %104 = vdwg.mxu0
    %v105 = vtanh.pop %v94
    %v106 = vtanh.pop %v97
    %v107 = vtanh.pop %v100
    %v108 = vtanh.pop %v103
    %v109 = vld [vmem:[%s3] sm:$0xff]
    %v110 = vld [vmem:[%s3 + $0x8] sm:$0xff]
    %v111 = vld [vmem:[%s3 + $0x10] sm:$0xff]
    %v112 = vld [vmem:[%s3 + $0x18] sm:$0xff]
    %v113 = vld [vmem:[%s4] sm:$0xff]
    %v114 = vld [vmem:[%s4 + $0x8] sm:$0xff]
    %v115 = vld [vmem:[%s4 + $0x10] sm:$0xff]
    %v116 = vld [vmem:[%s4 + $0x18] sm:$0xff]
    %118 = vset.pattern.permute.xlu0 0
    %119 = vperm.xlu0 %118, %v113
    %v120 = vpop.permute.xlu0 %119
    %123 = vset.pattern.permute.xlu0 0
    %124 = vperm.xlu0 %123, %v114
    %v125 = vpop.permute.xlu0 %124
    %128 = vset.pattern.permute.xlu0 0
    %129 = vperm.xlu0 %128, %v115
    %v130 = vpop.permute.xlu0 %129
    %133 = vset.pattern.permute.xlu0 0
    %134 = vperm.xlu0 %133, %v116
    %v135 = vpop.permute.xlu0 %134
    %vm137 = vcmask 261120
    %v139 = vsel %vm137, %v109, 0
    %v142 = vsel %vm137, %v110, 0
    %v145 = vsel %vm137, %v111, 0
    %v148 = vsel %vm137, %v112, 0
    %150 = vmatpush.msra.mxu0 0.0
    %151 = vmatpush.msra.mxu0 0.0
    %152 = vmatpush.msra.mxu0 0.0
    %153 = vmatpush.msra.mxu0 0.0
    %154 = vmatpush.msra.mxu0 0.0
    %155 = vmatpush.msra.mxu0 0.0
    %156 = vmatpush.msra.mxu0 0.0
    %157 = vmatpush.msra.mxu0 0.0
    %158 = vmatpush.msra.mxu0 0.0
    %159 = vmatpush.msra.mxu0 0.0
    %160 = vmatpush.msra.mxu0 0.0
    %161 = vmatpush.msra.mxu0 0.0
    %162 = vmatpush.msra.mxu0 %v108
    %163 = vmatpush.msra.mxu0 %v107
    %164 = vmatpush.msra.mxu0 %v106
    %165 = vmatpush.msra.mxu0 %v105
    %166 = vmatmul.f32.gmra.mxu0 %v139
    %v167 = vpop.f32.mrf.mxu0
    %v168 = vadd.f32 %v120, %v167
    %169 = vmatmul.f32.gmra.mxu0 %v142
    %v170 = vpop.f32.mrf.mxu0
    %v171 = vadd.f32 %v125, %v170
    %172 = vmatmul.f32.gmra.mxu0 %v145
    %v173 = vpop.f32.mrf.mxu0
    %v174 = vadd.f32 %v130, %v173
    %175 = vmatmul.f32.gmra.mxu0 %v148
    %v176 = vpop.f32.mrf.mxu0
    %v177 = vadd.f32 %v135, %v176
    %178 = vdwg.mxu0
    %v179 = vtanh.pop %v168
    %v180 = vtanh.pop %v171
    %v181 = vtanh.pop %v174
    %v182 = vtanh.pop %v177
    %v183 = vld [vmem:[%s5] sm:$0xff]
    %v184 = vld [vmem:[%s6] sm:$0xff]
    %186 = vset.pattern.permute.xlu0 0
    %187 = vperm.xlu0 %186, %v184
    %v188 = vpop.permute.xlu0 %187
    %v191 = vsel %vm137, %v183, 0
    %193 = vmatpush.msra.mxu0 0.0
    %194 = vmatpush.msra.mxu0 0.0
    %195 = vmatpush.msra.mxu0 0.0
    %196 = vmatpush.msra.mxu0 0.0
    %197 = vmatpush.msra.mxu0 0.0
    %198 = vmatpush.msra.mxu0 0.0
    %199 = vmatpush.msra.mxu0 0.0
    %200 = vmatpush.msra.mxu0 0.0
    %201 = vmatpush.msra.mxu0 0.0
    %202 = vmatpush.msra.mxu0 0.0
    %203 = vmatpush.msra.mxu0 0.0
    %204 = vmatpush.msra.mxu0 0.0
    %205 = vmatpush.msra.mxu0 %v182
    %206 = vmatpush.msra.mxu0 %v181
    %207 = vmatpush.msra.mxu0 %v180
    %208 = vmatpush.msra.mxu0 %v179
    %209 = vmatmul.f32.gmra.mxu0 %v191
    %v210 = vpop.f32.mrf.mxu0
    %v211 = vadd.f32 %v188, %v210
    %212 = vdwg.mxu0
    %213 = vst.msk [vmem:[#allocation2] sm:$0xff] %vm57, %v211
    // Predicated region
    $region30: #{tpu_custom_call.1} parent=1 // pred_check
      _
    $region31: #{tpu_custom_call.1} parent=1 // pred_check_branch
      %215 = sbr.rel (0) target = $region33
    $region32: #{tpu_custom_call.1} parent=1 // pred_region
      %217 = vsyncadd [#allocation3], 0
      %s219 = sshll.u32 [#allocation2], 4
      %s220 = int_to_ptr.vmem [resolvable:$true] %s219
      %s221 = sshll.u32 %s7, 4
      %s222 = int_to_ptr.hbm [resolvable:$true] %s221
      %224 = dma.vmem_to_hbm [thread:$0]  %s220, 128, %s222, [#allocation3]
    $region33: #{tpu_custom_call.1} parent=1 // pred_fallthru
      _
    // Predicated region
    $region34: #{tpu_custom_call.1} parent=1 // pred_check
      _
    $region35: #{tpu_custom_call.1} parent=1 // pred_check_branch
      %226 = sbr.rel (0) target = $region37
    $region36: #{tpu_custom_call.1} parent=1 // pred_region
      %228 = dma.done [#allocation3], 128
    $region37: #{tpu_custom_call.1} parent=1 // pred_fallthru
      _
    %229 = vsyncpa [#allocation3], 1

</llo_original>
